<compile_context>
chip_gen: v7x
topology: tpu7x:2x2x1
jax: 0.10.0
libtpu: 0.0.40
codegen_flags: <defaults>
</compile_context>

<pallas_src>
import jax
import jax.numpy as jnp
from jax.experimental import pallas as pl
from jax.experimental.pallas import tpu as pltpu

_LANES = 128


def _make_tanh_norm_kernel(x_center: float, y_center: float):
    """Elementwise: y = h * tanh((f - x_center) * (1/h)) + y_center."""

    def kernel(h_ref, f_ref, o_ref):
        # Learned scalar read once from SMEM; reciprocal stays on the scalar path.
        h = h_ref[0].astype(jnp.float32)
        inv_h = 1.0 / h
        f = f_ref[...].astype(jnp.float32)
        y = h * jnp.tanh((f - x_center) * inv_h) + y_center
        o_ref[...] = y.astype(o_ref.dtype)

    return kernel


def tanh_normalization(f: jax.Array, h: jax.Array,
                       to_min: float, to_max: float,
                       Xmin: float, Xmax: float,
                       *, block_rows: int = 1024) -> jax.Array:
    """Pallas TPU implementation of Tanh_Normalization.forward."""
    x_center = float((Xmax + Xmin) / 2.0)
    y_center = float((to_max + to_min) / 2.0)

    orig_shape = f.shape
    orig_dtype = f.dtype
    total = 1
    for d in orig_shape:
        total *= int(d)

    # Lane-dense 2-D view: (rows, 128). Pad only when the flat size is ragged
    # (not a multiple of 128); the common case avoids any extra HBM pass.
    flat = f.reshape(-1)
    padded = pl.cdiv(total, _LANES) * _LANES
    needs_pad = padded != total
    if needs_pad:
        # TODO(synk): handle the <128-element ragged tail separately instead of
        # padding the whole flat vector (extra read+write pass for odd sizes).
        flat = jnp.pad(flat, (0, padded - total))
    rows = padded // _LANES
    f2d = flat.reshape(rows, _LANES)

    # Block sizing: ~512 KiB f32 per block (1024 x 128); double-buffered
    # in+out stays well under scoped VMEM on v5e/v6e/v7x. Tiny inputs become a
    # single full-extent block (full-dim block_shape is always legal).
    tr = block_rows if rows > block_rows else rows
    grid = (pl.cdiv(rows, tr),)

    # Learned scalar h goes to SMEM as f32 (compute is f32 internally).
    h_arr = jnp.asarray(h, dtype=jnp.float32).reshape((1,))

    kernel = _make_tanh_norm_kernel(x_center, y_center)

    out2d = pl.pallas_call(
        kernel,
        out_shape=jax.ShapeDtypeStruct((rows, _LANES), orig_dtype),
        grid=grid,
        in_specs=[
            pl.BlockSpec(memory_space=pltpu.SMEM),         # h scalar (untiled)
            pl.BlockSpec((tr, _LANES), lambda i: (i, 0)),  # f tile (VMEM)
        ],
        out_specs=pl.BlockSpec((tr, _LANES), lambda i: (i, 0)),
        input_output_aliases={1: 0},                       # write f slab in place
        compiler_params=pltpu.CompilerParams(
            dimension_semantics=("parallel",)),            # 2-TC split on v7x
    )(h_arr, f2d)

    out_flat = out2d.reshape(-1)
    if needs_pad:
        out_flat = out_flat[:total]
    return out_flat.reshape(orig_shape)


def tanh_normalization_ref(f, h, to_min, to_max, Xmin, Xmax):
    x_center = (Xmax + Xmin) / 2.0
    y_center = (to_max + to_min) / 2.0
    return h * jnp.tanh((f - x_center) / h) + y_center


if __name__ == "__main__":
    # Module hyperparameters (match the PyTorch __init__ semantics).
    to_min, to_max = -1.0, 1.0
    Xmin, Xmax = -3.0, 3.0
    # Parameter h initialized deterministically as amplitude = (to_max - to_min)/2.
    h = jnp.asarray((to_max - to_min) / 2.0, dtype=jnp.float32)

    key = jax.random.PRNGKey(0)
    x = jax.random.normal(key, (2, 4, 16, 16), dtype=jnp.float32) * 2.0  # NCHW

    out = tanh_normalization(x, h, to_min, to_max, Xmin, Xmax)
    out = jax.block_until_ready(out)

    ref = tanh_normalization_ref(x, h, to_min, to_max, Xmin, Xmax)
    assert out.shape == x.shape and out.dtype == x.dtype
    assert jnp.allclose(out, ref, atol=1e-5, rtol=1e-5)

    print("KERNEL_OK")
</pallas_src>

<mosaic_0001>
module attributes {stable_mosaic.version = 11 : i64} {
  func.func @kernel(%arg0: i32, %arg1: memref<1xf32, #tpu.memory_space<smem>>, %arg2: memref<16x128xf32, #tpu.memory_space<vmem>>, %arg3: memref<16x128xf32, #tpu.memory_space<vmem>>) attributes {dimension_semantics = [#tpu.dimension_semantics<parallel>], iteration_bounds = array<i64: 1>, scalar_prefetch = 0 : i64, scratch_operands = 0 : i64, tpu.core_type = #tpu.core_type<tc>, window_params = [{transform_indices = @transform_0, window_bounds = array<i64: 1>}, {transform_indices = @transform_1, window_bounds = array<i64: 16, 128>}, {transform_indices = @transform_2, window_bounds = array<i64: 16, 128>}]} {
    %c0 = arith.constant 0 : index
    %0 = memref.load %arg1[%c0] : memref<1xf32, #tpu.memory_space<smem>>
    %cst = arith.constant 1.000000e+00 : f32
    %1 = arith.divf %cst, %0 : f32
    %c0_0 = arith.constant 0 : index
    %c0_1 = arith.constant 0 : index
    %2 = vector.load %arg2[%c0_0, %c0_1] : memref<16x128xf32, #tpu.memory_space<vmem>>, vector<16x128xf32>
    %cst_2 = arith.constant 0.000000e+00 : f32
    %3 = vector.broadcast %cst_2 : f32 to vector<16x128xf32>
    %4 = arith.subf %2, %3 : vector<16x128xf32>
    %5 = vector.broadcast %1 : f32 to vector<16x128xf32>
    %6 = arith.mulf %4, %5 : vector<16x128xf32>
    %7 = math.tanh %6 : vector<16x128xf32>
    %8 = vector.broadcast %0 : f32 to vector<16x128xf32>
    %9 = arith.mulf %8, %7 : vector<16x128xf32>
    %cst_3 = arith.constant 0.000000e+00 : f32
    %10 = vector.broadcast %cst_3 : f32 to vector<16x128xf32>
    %11 = arith.addf %9, %10 : vector<16x128xf32>
    %c0_4 = arith.constant 0 : index
    %c0_5 = arith.constant 0 : index
    %12 = vector.load %arg3[%c0_4, %c0_5] : memref<16x128xf32, #tpu.memory_space<vmem>>, vector<16x128xf32>
    tpu.vector_store %arg3[%c0_4, %c0_5], %11 {strides = array<i32>} : memref<16x128xf32, #tpu.memory_space<vmem>>, vector<16x128xf32>,
    return
  }
  func.func @transform_0(%arg0: i32) -> i32 {
    %c0_i32 = arith.constant 0 : i32
    %c0_i32_0 = arith.constant 0 : i32
    return %c0_i32 : i32
  }
  func.func @transform_1(%arg0: i32) -> (i32, i32) {
    %c0_i32 = arith.constant 0 : i32
    %c0_i32_0 = arith.constant 0 : i32
    return %arg0, %c0_i32 : i32, i32
  }
  func.func @transform_2(%arg0: i32) -> (i32, i32) {
    %c0_i32 = arith.constant 0 : i32
    %c0_i32_0 = arith.constant 0 : i32
    return %arg0, %c0_i32 : i32, i32
  }
}

</mosaic_0001>

<llo_original>
// kernel: tpu_custom_call.1
$region0: #{tpu_custom_call.1}
  #allocation0 [shape = 'u32[]', space=smem, size = 0x4, offset = 0x4, fixed_abs, tag = 'smem constant byte address 0x4 - core index']
  #allocation1 [shape = 'u32[144,128]{1,0:T(1,128)}', space=vmem, size = 0x12000, scoped, tag = 'internal scratch']
  #allocation2 [shape = 'f32[1]{0:T(128)S(6)}', space=smem, size = 0x200, scoped, tag = 'scoped memory for tpu_custom_call.1']
  %s0 = inlined_call_operand.<no memory space> [shape: f32[1], index: 0, kind: input, shape index: {}]
  %s1 = inlined_call_operand.hbm [shape: f32[16,128], index: 1, kind: input, shape index: {}, may-alias: {1,2}]
  %s2 = inlined_call_operand.hbm [shape: f32[16,128], index: 2, kind: output, shape index: {}, may-alias: {1,2}]
  %s3 = sld [smem:[#allocation0]]
  $region22: #{tpu_custom_call.1} parent=0
    _
  %s5 = ssub.s32 1, %s3
  %s6 = scalar_select 0, %s5, %s3
  %7 = sst [smem:[#allocation2]] %s0
  $region1: #{tpu_custom_call.1} parent=0
    #allocation3 [shape = 'u8[8192]{0}', space=vmem, size = 0x2000, scoped, tag = 'input window, operand 1, single buffered']
    #allocation4 [shape = 's32[1]{0}', space=sflag, size = 0x4, scoped, tag = 'scoped memory for tpu_custom_call.1']
    #allocation5 [shape = 's32[1]{0}', space=sflag, size = 0x4, scoped, tag = 'scoped memory for tpu_custom_call.1']
    #allocation6 [shape = 'u8[8192]{0}', space=vmem, size = 0x2000, scoped, tag = 'output window, operand 0, single buffered']
    %8 = vsyncpa [#allocation4], 0
    %9 = vsyncpa [#allocation5], 0
    // Predicated region
    $region2: #{tpu_custom_call.1} parent=1 // pred_check
      _
    $region3: #{tpu_custom_call.1} parent=1 // pred_check_branch
      %11 = sbr.rel (0) target = $region5
    $region4: #{tpu_custom_call.1} parent=1 // pred_region
      _
    $region5: #{tpu_custom_call.1} parent=1 // pred_fallthru
      _
    // Predicated region
    $region6: #{tpu_custom_call.1} parent=1 // pred_check
      _
    $region7: #{tpu_custom_call.1} parent=1 // pred_check_branch
      %13 = sbr.rel (0) target = $region9
    $region8: #{tpu_custom_call.1} parent=1 // pred_region
      %s15 = ssub.s32 256, 256
      %16 = vsyncadd [#allocation4], %s15
      %s17 = sshll.u32 [#allocation3], 4
      %s18 = int_to_ptr.vmem [resolvable:$true] %s17
      %23 = dma.hbm_to_vmem [thread:$0]  %s1, 256, %s18, [#allocation4], 128, 128, 8
    $region9: #{tpu_custom_call.1} parent=1 // pred_fallthru
      _
    // Predicated region
    $region10: #{tpu_custom_call.1} parent=1 // pred_check
      _
    $region11: #{tpu_custom_call.1} parent=1 // pred_check_branch
      %25 = sbr.rel (0) target = $region13
    $region12: #{tpu_custom_call.1} parent=1 // pred_region
      %26 = dma.done [#allocation4], 256
    $region13: #{tpu_custom_call.1} parent=1 // pred_fallthru
      _
    %s27 = sld [smem:[#allocation2]]
    %v28 = vstv %s27
    %v29 = vrcp.pop %v28
    %s30 = vtos %v29
    %v31 = vld [vmem:[#allocation3] sm:$0xff]
    %v32 = vld [vmem:[#allocation3 + $0x8] sm:$0xff]
    %v33 = vstv %s30
    %v34 = vmul.f32 %v31, %v33
    %v35 = vmul.f32 %v32, %v33
    %v36 = vtanh.pop %v34
    %v37 = vtanh.pop %v35
    %v38 = vstv %s27
    %v39 = vmul.f32 %v38, %v36
    %v40 = vmul.f32 %v38, %v37
    %v41 = vadd.f32 %v39, 0.0
    %v42 = vadd.f32 %v40, 0.0
    %43 = vst [vmem:[#allocation6] sm:$0xff] %v41
    %44 = vst [vmem:[#allocation6 + $0x8] sm:$0xff] %v42
    // Predicated region
    $region14: #{tpu_custom_call.1} parent=1 // pred_check
      _
    $region15: #{tpu_custom_call.1} parent=1 // pred_check_branch
      %46 = sbr.rel (0) target = $region17
    $region16: #{tpu_custom_call.1} parent=1 // pred_region
      %s48 = ssub.s32 256, 256
      %49 = vsyncadd [#allocation5], %s48
      %s50 = sshll.u32 [#allocation6], 4
      %s51 = int_to_ptr.vmem [resolvable:$true] %s50
      %56 = dma.vmem_to_hbm [thread:$0]  %s51, 256, %s2, [#allocation5], 128, 128, 8
    $region17: #{tpu_custom_call.1} parent=1 // pred_fallthru
      _
    // Predicated region
    $region18: #{tpu_custom_call.1} parent=1 // pred_check
      _
    $region19: #{tpu_custom_call.1} parent=1 // pred_check_branch
      %58 = sbr.rel (0) target = $region21
    $region20: #{tpu_custom_call.1} parent=1 // pred_region
      %59 = dma.done [#allocation5], 256
    $region21: #{tpu_custom_call.1} parent=1 // pred_fallthru
      _
    %60 = vsyncpa [#allocation4], 1
    %61 = vsyncpa [#allocation5], 1

</llo_original>
